<compile_context>
chip_gen: v7x
topology: tpu7x:2x2x1
jax: 0.10.0
libtpu: 0.0.40
codegen_flags: <defaults>
</compile_context>

<pallas_src>
import math

import jax
import jax.numpy as jnp
from jax.experimental import pallas as pl
from jax.experimental.pallas import tpu as pltpu


# ----------------------------- kernels ------------------------------------- #

def _pe_add_kernel(x_ref, pe_ref, o_ref):
    # x_ref: (ts, B, D); pe_ref: (ts, D) -> broadcast over the batch dim.
    o_ref[...] = x_ref[...] + pe_ref[...][:, None, :]


def _pe_add_dropout_kernel(x_ref, pe_ref, mask_ref, o_ref):
    # mask_ref holds the pre-scaled inverted-dropout keep mask: 0 or 1/(1-p).
    o_ref[...] = (x_ref[...] + pe_ref[...][:, None, :]) * mask_ref[...]


# --------------------------- parameter setup ------------------------------- #

def make_positional_encoding_params(d_model, max_len=5000, dtype=jnp.float32):
    """Deterministic construction of the `pe` buffer, mirroring __init__."""
    position = jnp.arange(max_len, dtype=jnp.float32)[:, None]              # (max_len, 1)
    div_term = jnp.exp(jnp.arange(0, d_model, 2, dtype=jnp.float32)
                       * -(math.log(10000.0) / d_model))                    # (d_model//2,)
    angles = position * div_term                                            # (max_len, d_model//2)
    pe = jnp.zeros((max_len, 1, d_model), dtype=jnp.float32)
    pe = pe.at[:, 0, 0::2].set(jnp.sin(angles))
    pe = pe.at[:, 0, 1::2].set(jnp.cos(angles))
    return pe.astype(dtype)


# ------------------------------ wrapper ------------------------------------ #

# Budget for live, double-buffered tiles; conservative enough for v7x's 64 MiB
# per-TC VMEM while still giving big (near-roofline) tiles on v5e/v6e.
_VMEM_TILE_BUDGET_BYTES = 24 * 1024 * 1024
# Raise the scoped VMEM limit above the v5e 16 MiB default but stay well under
# v7x's 64 MiB physical VMEM.
_VMEM_LIMIT_BYTES = 48 * 1024 * 1024


def _choose_seq_tile(S, B, D, itemsize, n_slabs, max_seq_tile=None):
    """Largest multiple-of-8 sequence tile whose double-buffered footprint fits
    the VMEM budget.  n_slabs = number of (ts, B, D) buffers (x, out[, mask])."""
    # 2x for BlockSpec double-buffering; pe tile is (ts, D).
    bytes_per_row = 2 * (n_slabs * B * D + D) * itemsize
    ts = max(8, (_VMEM_TILE_BUDGET_BYTES // bytes_per_row) // 8 * 8)
    if max_seq_tile is not None:
        ts = min(ts, max(8, (max_seq_tile // 8) * 8))
    # If ts >= S we use the full sequence (block dim == full dim is always legal,
    # even when S is not a multiple of 8).
    return min(ts, S)


def positional_encoding_forward(x, pe, *, dropout_p=0.1, training=False,
                                rng_key=None, max_seq_tile=None):
    """x: [seq_len, batch, d_model]; pe: [max_len, 1, d_model]."""
    S, B, D = x.shape
    # Squeeze the size-1 batch dim: a 2D (ts, D) pe block packs 8 rows per
    # (8,128) tile instead of one row per tile, shrinking VMEM and making the
    # pe DMA dense.
    pe_slice = pe[:S, 0, :].astype(x.dtype)                                 # (S, D)

    if training and dropout_p > 0.0:
        if rng_key is None:
            rng_key = jax.random.PRNGKey(0)
        keep = jax.random.bernoulli(rng_key, 1.0 - dropout_p, (S, B, D))
        mask = keep.astype(x.dtype) * jnp.asarray(1.0 / (1.0 - dropout_p), x.dtype)
        n_slabs = 3     # x in, mask in, out
    else:
        mask = None
        n_slabs = 2     # x in, out

    ts = _choose_seq_tile(S, B, D, jnp.dtype(x.dtype).itemsize, n_slabs,
                          max_seq_tile=max_seq_tile)
    grid = (pl.cdiv(S, ts),)

    x_spec = pl.BlockSpec((ts, B, D), lambda i: (i, 0, 0))
    pe_spec = pl.BlockSpec((ts, D), lambda i: (i, 0))
    out_spec = pl.BlockSpec((ts, B, D), lambda i: (i, 0, 0))
    # NOTE: when d_model is a multiple of 128 (typical transformer widths) the
    # output is already lane-dense; small D (like the demo's 32) stores are
    # lane-masked but correct.

    if mask is None:
        kernel = _pe_add_kernel
        in_specs = [x_spec, pe_spec]
        operands = (x, pe_slice)
    else:
        kernel = _pe_add_dropout_kernel
        in_specs = [x_spec, pe_spec, pl.BlockSpec((ts, B, D), lambda i: (i, 0, 0))]
        operands = (x, pe_slice, mask)

    return pl.pallas_call(
        kernel,
        out_shape=jax.ShapeDtypeStruct((S, B, D), x.dtype),
        grid=grid,
        in_specs=in_specs,
        out_specs=out_spec,
        compiler_params=pltpu.CompilerParams(
            # Grid steps are fully independent (mask is precomputed per element),
            # so let v7x shard them across both TensorCores.
            dimension_semantics=("parallel",),
            vmem_limit_bytes=_VMEM_LIMIT_BYTES,
        ),
    )(*operands)


# ------------------------------- demo --------------------------------------- #

if __name__ == "__main__":
    # Small shapes consistent with the module: [seq_len, batch, d_model]
    seq_len, batch, d_model = 24, 2, 32
    max_len = 64  # synthetic buffer size (>= seq_len)

    key = jax.random.PRNGKey(0)
    x = jax.random.normal(key, (seq_len, batch, d_model), dtype=jnp.float32)
    pe = make_positional_encoding_params(d_model, max_len=max_len)

    ref = x + pe[:seq_len]

    # Eval-mode forward (dropout is identity), default (budget-driven) tiling.
    out = jax.block_until_ready(
        positional_encoding_forward(x, pe, dropout_p=0.1, training=False))
    assert out.shape == (seq_len, batch, d_model)
    assert jnp.allclose(out, ref, atol=1e-6), "eval mismatch vs reference"

    # Eval-mode forward again with a forced small sequence tile to exercise the
    # multi-step pipelined grid (grid = (3,)).
    out_tiled = jax.block_until_ready(
        positional_encoding_forward(x, pe, dropout_p=0.1, training=False,
                                    max_seq_tile=8))
    assert jnp.allclose(out_tiled, ref, atol=1e-6), "tiled eval mismatch vs reference"

    # Training-mode forward (inverted dropout) with a deterministic key; the
    # reference recomputes the same mask in plain JAX.
    drop_key = jax.random.PRNGKey(42)
    p = 0.1
    out_train = jax.block_until_ready(
        positional_encoding_forward(x, pe, dropout_p=p, training=True,
                                    rng_key=drop_key, max_seq_tile=8))
    keep_ref = jax.random.bernoulli(drop_key, 1.0 - p, x.shape)
    ref_train = (x + pe[:seq_len]) * (keep_ref.astype(x.dtype) / (1.0 - p))
    assert out_train.shape == (seq_len, batch, d_model)
    assert jnp.allclose(out_train, ref_train, atol=1e-5), "train mismatch vs reference"

    print("KERNEL_OK")
</pallas_src>

<mosaic_0001>
module attributes {stable_mosaic.version = 11 : i64} {
  func.func @_pe_add_kernel(%arg0: i32, %arg1: memref<24x2x32xf32, #tpu.memory_space<vmem>>, %arg2: memref<24x32xf32, #tpu.memory_space<vmem>>, %arg3: memref<24x2x32xf32, #tpu.memory_space<vmem>>) attributes {dimension_semantics = [#tpu.dimension_semantics<parallel>], iteration_bounds = array<i64: 1>, scalar_prefetch = 0 : i64, scratch_operands = 0 : i64, tpu.core_type = #tpu.core_type<tc>, window_params = [{transform_indices = @transform_0, window_bounds = array<i64: 24, 2, 32>}, {transform_indices = @transform_1, window_bounds = array<i64: 24, 32>}, {transform_indices = @transform_2, window_bounds = array<i64: 24, 2, 32>}]} {
    %c0 = arith.constant 0 : index
    %c0_0 = arith.constant 0 : index
    %c0_1 = arith.constant 0 : index
    %0 = vector.load %arg1[%c0, %c0_0, %c0_1] : memref<24x2x32xf32, #tpu.memory_space<vmem>>, vector<24x2x32xf32>
    %c0_2 = arith.constant 0 : index
    %c0_3 = arith.constant 0 : index
    %1 = vector.load %arg2[%c0_2, %c0_3] : memref<24x32xf32, #tpu.memory_space<vmem>>, vector<24x32xf32>
    %2 = vector.shape_cast %1 : vector<24x32xf32> to vector<24x1x32xf32>
    %3 = vector.broadcast %2 : vector<24x1x32xf32> to vector<24x2x32xf32>
    %4 = arith.addf %0, %3 : vector<24x2x32xf32>
    %c0_4 = arith.constant 0 : index
    %c0_5 = arith.constant 0 : index
    %c0_6 = arith.constant 0 : index
    %5 = vector.load %arg3[%c0_4, %c0_5, %c0_6] : memref<24x2x32xf32, #tpu.memory_space<vmem>>, vector<24x2x32xf32>
    tpu.vector_store %arg3[%c0_4, %c0_5, %c0_6], %4 {strides = array<i32>} : memref<24x2x32xf32, #tpu.memory_space<vmem>>, vector<24x2x32xf32>,
    return
  }
  func.func @transform_0(%arg0: i32) -> (i32, i32, i32) {
    %c0_i32 = arith.constant 0 : i32
    %c0_i32_0 = arith.constant 0 : i32
    %c0_i32_1 = arith.constant 0 : i32
    return %arg0, %c0_i32, %c0_i32_0 : i32, i32, i32
  }
  func.func @transform_1(%arg0: i32) -> (i32, i32) {
    %c0_i32 = arith.constant 0 : i32
    %c0_i32_0 = arith.constant 0 : i32
    return %arg0, %c0_i32 : i32, i32
  }
  func.func @transform_2(%arg0: i32) -> (i32, i32, i32) {
    %c0_i32 = arith.constant 0 : i32
    %c0_i32_0 = arith.constant 0 : i32
    %c0_i32_1 = arith.constant 0 : i32
    return %arg0, %c0_i32, %c0_i32_0 : i32, i32, i32
  }
}

</mosaic_0001>

<llo_original>
// kernel: tpu_custom_call.1
$region0: #{tpu_custom_call.1}
  #allocation0 [shape = 'u32[]', space=smem, size = 0x4, offset = 0x4, fixed_abs, tag = 'smem constant byte address 0x4 - core index']
  #allocation1 [shape = 'u32[144,128]{1,0:T(1,128)}', space=vmem, size = 0x12000, scoped, tag = 'internal scratch']
  %s0 = inlined_call_operand.hbm [shape: f32[24,2,32], index: 0, kind: input, shape index: {}]
  %s1 = inlined_call_operand.hbm [shape: f32[24,32], index: 1, kind: input, shape index: {}]
  %s2 = inlined_call_operand.hbm [shape: f32[24,2,32], index: 2, kind: output, shape index: {}]
  %s3 = sld [smem:[#allocation0]]
  $region26: #{tpu_custom_call.1} parent=0
    _
  %s5 = ssub.s32 1, %s3
  %s6 = scalar_select 0, %s5, %s3
  $region1: #{tpu_custom_call.1} parent=0
    #allocation2 [shape = 'u8[24576]{0}', space=vmem, size = 0x6000, scoped, tag = 'input window, operand 0, single buffered']
    #allocation3 [shape = 's32[1]{0}', space=sflag, size = 0x4, scoped, tag = 'scoped memory for tpu_custom_call.1']
    #allocation4 [shape = 's32[1]{0}', space=sflag, size = 0x4, scoped, tag = 'scoped memory for tpu_custom_call.1']
    #allocation5 [shape = 'u8[12288]{0}', space=vmem, size = 0x3000, scoped, tag = 'input window, operand 1, single buffered']
    #allocation6 [shape = 's32[1]{0}', space=sflag, size = 0x4, scoped, tag = 'scoped memory for tpu_custom_call.1']
    #allocation7 [shape = 'u8[24576]{0}', space=vmem, size = 0x6000, scoped, tag = 'output window, operand 0, single buffered']
    %7 = vsyncpa [#allocation3], 0
    %8 = vsyncpa [#allocation6], 0
    %9 = vsyncpa [#allocation4], 0
    // Predicated region
    $region2: #{tpu_custom_call.1} parent=1 // pred_check
      _
    $region3: #{tpu_custom_call.1} parent=1 // pred_check_branch
      %11 = sbr.rel (0) target = $region5
    $region4: #{tpu_custom_call.1} parent=1 // pred_region
      %s13 = ssub.s32 768, 768
      %14 = vsyncadd [#allocation3], %s13
      %s15 = sshll.u32 [#allocation2], 4
      %s16 = int_to_ptr.vmem [resolvable:$true] %s15
      %21 = dma.hbm_to_vmem [thread:$0]  %s0, 768, %s16, [#allocation3], 32, 32, 2
    $region5: #{tpu_custom_call.1} parent=1 // pred_fallthru
      _
    // Predicated region
    $region6: #{tpu_custom_call.1} parent=1 // pred_check
      _
    $region7: #{tpu_custom_call.1} parent=1 // pred_check_branch
      %23 = sbr.rel (0) target = $region9
    $region8: #{tpu_custom_call.1} parent=1 // pred_region
      %s25 = ssub.s32 384, 384
      %26 = vsyncadd [#allocation6], %s25
      %s27 = sshll.u32 [#allocation5], 4
      %s28 = int_to_ptr.vmem [resolvable:$true] %s27
      %33 = dma.hbm_to_vmem [thread:$0]  %s1, 384, %s28, [#allocation6], 128, 128, 8
    $region9: #{tpu_custom_call.1} parent=1 // pred_fallthru
      _
    // Predicated region
    $region10: #{tpu_custom_call.1} parent=1 // pred_check
      _
    $region11: #{tpu_custom_call.1} parent=1 // pred_check_branch
      %35 = sbr.rel (0) target = $region13
    $region12: #{tpu_custom_call.1} parent=1 // pred_region
      %36 = dma.done [#allocation3], 768
    $region13: #{tpu_custom_call.1} parent=1 // pred_fallthru
      _
    // Predicated region
    $region14: #{tpu_custom_call.1} parent=1 // pred_check
      _
    $region15: #{tpu_custom_call.1} parent=1 // pred_check_branch
      %38 = sbr.rel (0) target = $region17
    $region16: #{tpu_custom_call.1} parent=1 // pred_region
      %39 = dma.done [#allocation6], 384
    $region17: #{tpu_custom_call.1} parent=1 // pred_fallthru
      _
    %v40 = vld [vmem:[#allocation2] sm:$0x3]
    %v41 = vld [vmem:[#allocation2 + $0x2] sm:$0x3]
    %v42 = vld [vmem:[#allocation2 + $0x4] sm:$0x3]
    %v43 = vld [vmem:[#allocation2 + $0x6] sm:$0x3]
    %v44 = vld [vmem:[#allocation2 + $0x8] sm:$0x3]
    %v45 = vld [vmem:[#allocation2 + $0xa] sm:$0x3]
    %v46 = vld [vmem:[#allocation2 + $0xc] sm:$0x3]
    %v47 = vld [vmem:[#allocation2 + $0xe] sm:$0x3]
    %v48 = vld [vmem:[#allocation2 + $0x10] sm:$0x3]
    %v49 = vld [vmem:[#allocation2 + $0x12] sm:$0x3]
    %v50 = vld [vmem:[#allocation2 + $0x14] sm:$0x3]
    %v51 = vld [vmem:[#allocation2 + $0x16] sm:$0x3]
    %v52 = vld [vmem:[#allocation2 + $0x18] sm:$0x3]
    %v53 = vld [vmem:[#allocation2 + $0x1a] sm:$0x3]
    %v54 = vld [vmem:[#allocation2 + $0x1c] sm:$0x3]
    %v55 = vld [vmem:[#allocation2 + $0x1e] sm:$0x3]
    %v56 = vld [vmem:[#allocation2 + $0x20] sm:$0x3]
    %v57 = vld [vmem:[#allocation2 + $0x22] sm:$0x3]
    %v58 = vld [vmem:[#allocation2 + $0x24] sm:$0x3]
    %v59 = vld [vmem:[#allocation2 + $0x26] sm:$0x3]
    %v60 = vld [vmem:[#allocation2 + $0x28] sm:$0x3]
    %v61 = vld [vmem:[#allocation2 + $0x2a] sm:$0x3]
    %v62 = vld [vmem:[#allocation2 + $0x2c] sm:$0x3]
    %v63 = vld [vmem:[#allocation2 + $0x2e] sm:$0x3]
    %v64 = vld [vmem:[#allocation5] sm:$0xff]
    %v65 = vld [vmem:[#allocation5 + $0x8] sm:$0xff]
    %v66 = vld [vmem:[#allocation5 + $0x10] sm:$0xff]
    %v70 = vcombine.high %v64, %v64
    %v72 = vunpack.c.l.s4 1966171168
    %v73 = vunpack.c.0.s8 %v72
    %v74 = vlaneseq
    %v75 = vshrl.u32 %v74, 7
    %v76 = vsub.s32 %v73, %v75
    %v77 = vrot.slane %v64, %v76
    %v79 = vunpack.c.l.s4 1966171168
    %v80 = vunpack.c.0.s8 %v79
    %v81 = vlaneseq
    %v82 = vshrl.u32 %v81, 7
    %v83 = vsub.s32 %v80, %v82
    %v84 = vrot.slane %v70, %v83
    %v85 = vcombine.high %v77, %v77
    %v86 = vcombine.high %v84, %v84
    %v88 = vunpack.c.l.s4 1966171168
    %v89 = vunpack.c.0.s8 %v88
    %v90 = vlaneseq
    %v91 = vshrl.u32 %v90, 7
    %v92 = vsub.s32 %v89, %v91
    %v93 = vrot.slane %v77, %v92
    %v95 = vunpack.c.l.s4 1966171168
    %v96 = vunpack.c.0.s8 %v95
    %v97 = vlaneseq
    %v98 = vshrl.u32 %v97, 7
    %v99 = vsub.s32 %v96, %v98
    %v100 = vrot.slane %v84, %v99
    %v102 = vunpack.c.l.s4 1966171168
    %v103 = vunpack.c.0.s8 %v102
    %v104 = vlaneseq
    %v105 = vshrl.u32 %v104, 7
    %v106 = vsub.s32 %v103, %v105
    %v107 = vrot.slane %v85, %v106
    %v109 = vunpack.c.l.s4 1966171168
    %v110 = vunpack.c.0.s8 %v109
    %v111 = vlaneseq
    %v112 = vshrl.u32 %v111, 7
    %v113 = vsub.s32 %v110, %v112
    %v114 = vrot.slane %v86, %v113
    %v115 = vcombine.high %v93, %v93
    %v116 = vcombine.high %v100, %v100
    %v117 = vcombine.high %v107, %v107
    %v118 = vcombine.high %v114, %v114
    %v119 = vcombine.high %v65, %v65
    %v121 = vunpack.c.l.s4 1966171168
    %v122 = vunpack.c.0.s8 %v121
    %v123 = vlaneseq
    %v124 = vshrl.u32 %v123, 7
    %v125 = vsub.s32 %v122, %v124
    %v126 = vrot.slane %v65, %v125
    %v128 = vunpack.c.l.s4 1966171168
    %v129 = vunpack.c.0.s8 %v128
    %v130 = vlaneseq
    %v131 = vshrl.u32 %v130, 7
    %v132 = vsub.s32 %v129, %v131
    %v133 = vrot.slane %v119, %v132
    %v134 = vcombine.high %v126, %v126
    %v135 = vcombine.high %v133, %v133
    %v137 = vunpack.c.l.s4 1966171168
    %v138 = vunpack.c.0.s8 %v137
    %v139 = vlaneseq
    %v140 = vshrl.u32 %v139, 7
    %v141 = vsub.s32 %v138, %v140
    %v142 = vrot.slane %v126, %v141
    %v144 = vunpack.c.l.s4 1966171168
    %v145 = vunpack.c.0.s8 %v144
    %v146 = vlaneseq
    %v147 = vshrl.u32 %v146, 7
    %v148 = vsub.s32 %v145, %v147
    %v149 = vrot.slane %v133, %v148
    %v151 = vunpack.c.l.s4 1966171168
    %v152 = vunpack.c.0.s8 %v151
    %v153 = vlaneseq
    %v154 = vshrl.u32 %v153, 7
    %v155 = vsub.s32 %v152, %v154
    %v156 = vrot.slane %v134, %v155
    %v158 = vunpack.c.l.s4 1966171168
    %v159 = vunpack.c.0.s8 %v158
    %v160 = vlaneseq
    %v161 = vshrl.u32 %v160, 7
    %v162 = vsub.s32 %v159, %v161
    %v163 = vrot.slane %v135, %v162
    %v164 = vcombine.high %v142, %v142
    %v165 = vcombine.high %v149, %v149
    %v166 = vcombine.high %v156, %v156
    %v167 = vcombine.high %v163, %v163
    %v168 = vcombine.high %v66, %v66
    %v170 = vunpack.c.l.s4 1966171168
    %v171 = vunpack.c.0.s8 %v170
    %v172 = vlaneseq
    %v173 = vshrl.u32 %v172, 7
    %v174 = vsub.s32 %v171, %v173
    %v175 = vrot.slane %v66, %v174
    %v177 = vunpack.c.l.s4 1966171168
    %v178 = vunpack.c.0.s8 %v177
    %v179 = vlaneseq
    %v180 = vshrl.u32 %v179, 7
    %v181 = vsub.s32 %v178, %v180
    %v182 = vrot.slane %v168, %v181
    %v183 = vcombine.high %v175, %v175
    %v184 = vcombine.high %v182, %v182
    %v186 = vunpack.c.l.s4 1966171168
    %v187 = vunpack.c.0.s8 %v186
    %v188 = vlaneseq
    %v189 = vshrl.u32 %v188, 7
    %v190 = vsub.s32 %v187, %v189
    %v191 = vrot.slane %v175, %v190
    %v193 = vunpack.c.l.s4 1966171168
    %v194 = vunpack.c.0.s8 %v193
    %v195 = vlaneseq
    %v196 = vshrl.u32 %v195, 7
    %v197 = vsub.s32 %v194, %v196
    %v198 = vrot.slane %v182, %v197
    %v200 = vunpack.c.l.s4 1966171168
    %v201 = vunpack.c.0.s8 %v200
    %v202 = vlaneseq
    %v203 = vshrl.u32 %v202, 7
    %v204 = vsub.s32 %v201, %v203
    %v205 = vrot.slane %v183, %v204
    %v207 = vunpack.c.l.s4 1966171168
    %v208 = vunpack.c.0.s8 %v207
    %v209 = vlaneseq
    %v210 = vshrl.u32 %v209, 7
    %v211 = vsub.s32 %v208, %v210
    %v212 = vrot.slane %v184, %v211
    %v213 = vcombine.high %v191, %v191
    %v214 = vcombine.high %v198, %v198
    %v215 = vcombine.high %v205, %v205
    %v216 = vcombine.high %v212, %v212
    %v217 = vlaneseq
    %v218 = vshrl.u32 %v217, 7
    %v219 = vsub.s32 0, %v218
    %v220 = vrot.slane %v93, %v219
    %v221 = vlaneseq
    %v222 = vshrl.u32 %v221, 7
    %v223 = vsub.s32 0, %v222
    %v224 = vrot.slane %v107, %v223
    %v225 = vlaneseq
    %v226 = vshrl.u32 %v225, 7
    %v227 = vsub.s32 0, %v226
    %v228 = vrot.slane %v115, %v227
    %v229 = vlaneseq
    %v230 = vshrl.u32 %v229, 7
    %v231 = vsub.s32 0, %v230
    %v232 = vrot.slane %v117, %v231
    %v233 = vlaneseq
    %v234 = vshrl.u32 %v233, 7
    %v235 = vsub.s32 0, %v234
    %v236 = vrot.slane %v100, %v235
    %v237 = vlaneseq
    %v238 = vshrl.u32 %v237, 7
    %v239 = vsub.s32 0, %v238
    %v240 = vrot.slane %v114, %v239
    %v241 = vlaneseq
    %v242 = vshrl.u32 %v241, 7
    %v243 = vsub.s32 0, %v242
    %v244 = vrot.slane %v116, %v243
    %v245 = vlaneseq
    %v246 = vshrl.u32 %v245, 7
    %v247 = vsub.s32 0, %v246
    %v248 = vrot.slane %v118, %v247
    %v249 = vlaneseq
    %v250 = vshrl.u32 %v249, 7
    %v251 = vsub.s32 0, %v250
    %v252 = vrot.slane %v142, %v251
    %v253 = vlaneseq
    %v254 = vshrl.u32 %v253, 7
    %v255 = vsub.s32 0, %v254
    %v256 = vrot.slane %v156, %v255
    %v257 = vlaneseq
    %v258 = vshrl.u32 %v257, 7
    %v259 = vsub.s32 0, %v258
    %v260 = vrot.slane %v164, %v259
    %v261 = vlaneseq
    %v262 = vshrl.u32 %v261, 7
    %v263 = vsub.s32 0, %v262
    %v264 = vrot.slane %v166, %v263
    %v265 = vlaneseq
    %v266 = vshrl.u32 %v265, 7
    %v267 = vsub.s32 0, %v266
    %v268 = vrot.slane %v149, %v267
    %v269 = vlaneseq
    %v270 = vshrl.u32 %v269, 7
    %v271 = vsub.s32 0, %v270
    %v272 = vrot.slane %v163, %v271
    %v273 = vlaneseq
    %v274 = vshrl.u32 %v273, 7
    %v275 = vsub.s32 0, %v274
    %v276 = vrot.slane %v165, %v275
    %v277 = vlaneseq
    %v278 = vshrl.u32 %v277, 7
    %v279 = vsub.s32 0, %v278
    %v280 = vrot.slane %v167, %v279
    %v281 = vlaneseq
    %v282 = vshrl.u32 %v281, 7
    %v283 = vsub.s32 0, %v282
    %v284 = vrot.slane %v191, %v283
    %v285 = vlaneseq
    %v286 = vshrl.u32 %v285, 7
    %v287 = vsub.s32 0, %v286
    %v288 = vrot.slane %v205, %v287
    %v289 = vlaneseq
    %v290 = vshrl.u32 %v289, 7
    %v291 = vsub.s32 0, %v290
    %v292 = vrot.slane %v213, %v291
    %v293 = vlaneseq
    %v294 = vshrl.u32 %v293, 7
    %v295 = vsub.s32 0, %v294
    %v296 = vrot.slane %v215, %v295
    %v297 = vlaneseq
    %v298 = vshrl.u32 %v297, 7
    %v299 = vsub.s32 0, %v298
    %v300 = vrot.slane %v198, %v299
    %v301 = vlaneseq
    %v302 = vshrl.u32 %v301, 7
    %v303 = vsub.s32 0, %v302
    %v304 = vrot.slane %v212, %v303
    %v305 = vlaneseq
    %v306 = vshrl.u32 %v305, 7
    %v307 = vsub.s32 0, %v306
    %v308 = vrot.slane %v214, %v307
    %v309 = vlaneseq
    %v310 = vshrl.u32 %v309, 7
    %v311 = vsub.s32 0, %v310
    %v312 = vrot.slane %v216, %v311
    %v337 = vadd.f32 %v40, %v220
    %v338 = vadd.f32 %v41, %v224
    %v339 = vadd.f32 %v42, %v228
    %v340 = vadd.f32 %v43, %v232
    %v341 = vadd.f32 %v44, %v236
    %v342 = vadd.f32 %v45, %v240
    %v343 = vadd.f32 %v46, %v244
    %v344 = vadd.f32 %v47, %v248
    %v345 = vadd.f32 %v48, %v252
    %v346 = vadd.f32 %v49, %v256
    %v347 = vadd.f32 %v50, %v260
    %v348 = vadd.f32 %v51, %v264
    %v349 = vadd.f32 %v52, %v268
    %v350 = vadd.f32 %v53, %v272
    %v351 = vadd.f32 %v54, %v276
    %v352 = vadd.f32 %v55, %v280
    %v353 = vadd.f32 %v56, %v284
    %v354 = vadd.f32 %v57, %v288
    %v355 = vadd.f32 %v58, %v292
    %v356 = vadd.f32 %v59, %v296
    %v357 = vadd.f32 %v60, %v300
    %v358 = vadd.f32 %v61, %v304
    %v359 = vadd.f32 %v62, %v308
    %v360 = vadd.f32 %v63, %v312
    %vm361 = vcmask 254976
    %362 = vst.msk [vmem:[#allocation7] sm:$0x3] %vm361, %v337
    %363 = vst.msk [vmem:[#allocation7 + $0x2] sm:$0x3] %vm361, %v338
    %364 = vst.msk [vmem:[#allocation7 + $0x4] sm:$0x3] %vm361, %v339
    %365 = vst.msk [vmem:[#allocation7 + $0x6] sm:$0x3] %vm361, %v340
    %366 = vst.msk [vmem:[#allocation7 + $0x8] sm:$0x3] %vm361, %v341
    %367 = vst.msk [vmem:[#allocation7 + $0xa] sm:$0x3] %vm361, %v342
    %368 = vst.msk [vmem:[#allocation7 + $0xc] sm:$0x3] %vm361, %v343
    %369 = vst.msk [vmem:[#allocation7 + $0xe] sm:$0x3] %vm361, %v344
    %370 = vst.msk [vmem:[#allocation7 + $0x10] sm:$0x3] %vm361, %v345
    %371 = vst.msk [vmem:[#allocation7 + $0x12] sm:$0x3] %vm361, %v346
    %372 = vst.msk [vmem:[#allocation7 + $0x14] sm:$0x3] %vm361, %v347
    %373 = vst.msk [vmem:[#allocation7 + $0x16] sm:$0x3] %vm361, %v348
    %374 = vst.msk [vmem:[#allocation7 + $0x18] sm:$0x3] %vm361, %v349
    %375 = vst.msk [vmem:[#allocation7 + $0x1a] sm:$0x3] %vm361, %v350
    %376 = vst.msk [vmem:[#allocation7 + $0x1c] sm:$0x3] %vm361, %v351
    %377 = vst.msk [vmem:[#allocation7 + $0x1e] sm:$0x3] %vm361, %v352
    %378 = vst.msk [vmem:[#allocation7 + $0x20] sm:$0x3] %vm361, %v353
    %379 = vst.msk [vmem:[#allocation7 + $0x22] sm:$0x3] %vm361, %v354
    %380 = vst.msk [vmem:[#allocation7 + $0x24] sm:$0x3] %vm361, %v355
    %381 = vst.msk [vmem:[#allocation7 + $0x26] sm:$0x3] %vm361, %v356
    %382 = vst.msk [vmem:[#allocation7 + $0x28] sm:$0x3] %vm361, %v357
    %383 = vst.msk [vmem:[#allocation7 + $0x2a] sm:$0x3] %vm361, %v358
    %384 = vst.msk [vmem:[#allocation7 + $0x2c] sm:$0x3] %vm361, %v359
    %385 = vst.msk [vmem:[#allocation7 + $0x2e] sm:$0x3] %vm361, %v360
    // Predicated region
    $region18: #{tpu_custom_call.1} parent=1 // pred_check
      _
    $region19: #{tpu_custom_call.1} parent=1 // pred_check_branch
      %387 = sbr.rel (0) target = $region21
    $region20: #{tpu_custom_call.1} parent=1 // pred_region
      %s389 = ssub.s32 768, 768
      %390 = vsyncadd [#allocation4], %s389
      %s391 = sshll.u32 [#allocation7], 4
      %s392 = int_to_ptr.vmem [resolvable:$true] %s391
      %397 = dma.vmem_to_hbm [thread:$0]  %s392, 768, %s2, [#allocation4], 32, 32, 2
    $region21: #{tpu_custom_call.1} parent=1 // pred_fallthru
      _
    // Predicated region
    $region22: #{tpu_custom_call.1} parent=1 // pred_check
      _
    $region23: #{tpu_custom_call.1} parent=1 // pred_check_branch
      %399 = sbr.rel (0) target = $region25
    $region24: #{tpu_custom_call.1} parent=1 // pred_region
      %400 = dma.done [#allocation4], 768
    $region25: #{tpu_custom_call.1} parent=1 // pred_fallthru
      _
    %401 = vsyncpa [#allocation3], 1
    %402 = vsyncpa [#allocation6], 1
    %403 = vsyncpa [#allocation4], 1

</llo_original>
